<compile_context>
chip_gen: v5e
topology: v5e:2x2
jax: 0.10.0
libtpu: 0.0.40
codegen_flags: <defaults>
</compile_context>

<pallas_src>
import functools

import jax
import jax.numpy as jnp
from jax.experimental import pallas as pl
from jax.experimental.pallas import tpu as pltpu


def _round_up(v, m):
    return ((v + m - 1) // m) * m


def _gated_attn_kernel(x_ref, wab_ref, bab_ref, wc_ref, bc_ref, a_out_ref, *,
                       d_pad, n_classes):
    """One (TN, L) row tile: fused gate matmul -> tanh/sigmoid -> final linear."""
    # In-kernel bf16 cast (hides under the x-tile DMA; avoids a wrapper pass).
    x = x_ref[...].astype(jnp.bfloat16)                     # (TN, L)

    # Fused attention_a | attention_b projection: one wide MXU matmul.
    ab = (
        jnp.dot(x, wab_ref[...], preferred_element_type=jnp.float32)
        + bab_ref[...]
    )                                                       # (TN, 2*D_pad) f32
    a = jnp.tanh(ab[:, :d_pad])
    # sigmoid(v) == 0.5*(tanh(0.5*v)+1): one EUP push instead of exp+recip.
    b = 0.5 * (jnp.tanh(0.5 * ab[:, d_pad:]) + 1.0)

    gated = (a * b).astype(jnp.bfloat16)                    # (TN, D_pad) bf16
    A = (
        jnp.dot(gated, wc_ref[...], preferred_element_type=jnp.float32)
        + bc_ref[...]
    )                                                       # (TN, C_mxu) f32
    # Store only the real classes: the HBM output stays an exact (N, C) array.
    a_out_ref[...] = A[:, :n_classes].astype(a_out_ref.dtype)


def attn_net_gated_forward(x, wa, ba, wb, bb, wc, bc, *, block_n=2048):
    """Pallas wrapper.

    Args:
      x:  (N, L) float32 (passed to the kernel as-is; cast to bf16 in-kernel)
      wa: (L, D), ba: (D,)   -- attention_a Linear (already transposed)
      wb: (L, D), bb: (D,)   -- attention_b Linear (already transposed)
      wc: (D, C), bc: (C,)   -- attention_c Linear (already transposed)
      block_n: max row-tile size (default 2048; clamped to ceil(N/2) and
               rounded to a multiple of 8).
    Returns:
      (A, x) with A of shape (N, C) float32, matching the PyTorch forward.
    """
    N, L = x.shape
    D = wa.shape[1]
    C = wc.shape[1]

    # ---- weight packing (once per call, outside the kernel) ---------------
    # Each gate half padded to a 128-lane multiple so the kernel's column
    # split is lane-tile aligned.  Padded columns are exact zeros, which
    # contribute nothing downstream (tanh(0)*sigmoid(0) hits zero Wc rows).
    D_pad = _round_up(D, 128)
    C_mxu = _round_up(C, 128)

    wab = jnp.zeros((L, 2 * D_pad), jnp.bfloat16)
    wab = wab.at[:, :D].set(wa.astype(jnp.bfloat16))
    wab = wab.at[:, D_pad:D_pad + D].set(wb.astype(jnp.bfloat16))
    bab = jnp.zeros((1, 2 * D_pad), jnp.float32)
    bab = bab.at[0, :D].set(ba.astype(jnp.float32))
    bab = bab.at[0, D_pad:D_pad + D].set(bb.astype(jnp.float32))

    wc_pad = jnp.zeros((D_pad, C_mxu), jnp.bfloat16).at[:D, :C].set(
        wc.astype(jnp.bfloat16))
    bc_pad = jnp.zeros((1, C_mxu), jnp.float32).at[0, :C].set(
        bc.astype(jnp.float32))

    # ---- row tiling (no padding of x; partial edge tile is masked) ---------
    TN = min(block_n, _round_up(pl.cdiv(N, 2), 8))   # >= 2 grid steps (v7x megacore)
    TN = max(8, _round_up(TN, 8))
    grid = (pl.cdiv(N, TN),)

    cost = pl.CostEstimate(
        flops=int(2 * N * L * (2 * D_pad) + 2 * N * D_pad * C_mxu),
        transcendentals=int(2 * N * D_pad),
        bytes_accessed=int(
            x.size * x.dtype.itemsize + wab.size * 2 + wc_pad.size * 2
            + bab.size * 4 + bc_pad.size * 4 + N * C * 4),
    )

    kernel = functools.partial(_gated_attn_kernel, d_pad=D_pad, n_classes=C)

    A = pl.pallas_call(
        kernel,
        out_shape=jax.ShapeDtypeStruct((N, C), jnp.float32),
        grid=grid,
        in_specs=[
            pl.BlockSpec((TN, L), lambda i: (i, 0)),          # x tile (streamed)
            pl.BlockSpec((L, 2 * D_pad), lambda i: (0, 0)),   # fused gate weights (resident)
            pl.BlockSpec((1, 2 * D_pad), lambda i: (0, 0)),   # fused gate bias
            pl.BlockSpec((D_pad, C_mxu), lambda i: (0, 0)),   # attention_c weight (lane-padded)
            pl.BlockSpec((1, C_mxu), lambda i: (0, 0)),       # attention_c bias
        ],
        out_specs=pl.BlockSpec((TN, C), lambda i: (i, 0)),    # exact (N, C) output
        compiler_params=pltpu.CompilerParams(
            dimension_semantics=("parallel",),
            vmem_limit_bytes=48 * 1024 * 1024,
        ),
        cost_estimate=cost,
    )(x, wab, bab, wc_pad, bc_pad)

    return A, x


def init_params(key, L, D, C):
    """Deterministic PyTorch-Linear-style init (uniform +/- 1/sqrt(fan_in))."""
    ks = jax.random.split(key, 6)
    bnd_l = 1.0 / jnp.sqrt(L)
    bnd_d = 1.0 / jnp.sqrt(D)
    wa = jax.random.uniform(ks[0], (L, D), jnp.float32, -bnd_l, bnd_l)
    ba = jax.random.uniform(ks[1], (D,), jnp.float32, -bnd_l, bnd_l)
    wb = jax.random.uniform(ks[2], (L, D), jnp.float32, -bnd_l, bnd_l)
    bb = jax.random.uniform(ks[3], (D,), jnp.float32, -bnd_l, bnd_l)
    wc = jax.random.uniform(ks[4], (D, C), jnp.float32, -bnd_d, bnd_d)
    bc = jax.random.uniform(ks[5], (C,), jnp.float32, -bnd_d, bnd_d)
    return wa, ba, wb, bb, wc, bc


if __name__ == "__main__":
    # Small shapes consistent with the module (defaults are L=1024, D=256, C=1).
    # N=20 exercises both the 2-step megacore split (TN=16) and the masked
    # partial edge tile (4 rows); D=64 exercises the 128-lane gate padding.
    N, L, D, C = 20, 128, 64, 1

    key = jax.random.PRNGKey(0)
    kx, kp = jax.random.split(key)
    x = jax.random.normal(kx, (N, L), jnp.float32)
    wa, ba, wb, bb, wc, bc = init_params(kp, L, D, C)

    A, x_out = attn_net_gated_forward(x, wa, ba, wb, bb, wc, bc)
    jax.block_until_ready((A, x_out))

    # Pure-JAX f32 reference; bf16 MXU inputs -> relaxed tolerance.
    a_ref = jnp.tanh(x @ wa + ba)
    b_ref = jax.nn.sigmoid(x @ wb + bb)
    A_ref = (a_ref * b_ref) @ wc + bc
    assert A.shape == (N, C)
    assert x_out.shape == (N, L)
    assert jnp.allclose(A, A_ref, atol=3e-2, rtol=3e-2), "mismatch vs reference"
    assert jnp.array_equal(x_out, x), "x passthrough mismatch"

    print("KERNEL_OK")
</pallas_src>

<mosaic_0001>
module attributes {stable_mosaic.version = 11 : i64} {
  func.func @_gated_attn_kernel(%arg0: i32, %arg1: memref<16x128xf32, #tpu.memory_space<vmem>>, %arg2: memref<128x256xbf16, #tpu.memory_space<vmem>>, %arg3: memref<1x256xf32, #tpu.memory_space<vmem>>, %arg4: memref<128x128xbf16, #tpu.memory_space<vmem>>, %arg5: memref<1x128xf32, #tpu.memory_space<vmem>>, %arg6: memref<16x1xf32, #tpu.memory_space<vmem>>) attributes {dimension_semantics = [#tpu.dimension_semantics<parallel>], iteration_bounds = array<i64: 2>, scalar_prefetch = 0 : i64, scratch_operands = 0 : i64, tpu.core_type = #tpu.core_type<tc>, window_params = [{transform_indices = @transform_0, window_bounds = array<i64: 16, 128>}, {pipeline_mode = #tpu.pipeline_mode<synchronous>, transform_indices = @transform_1, window_bounds = array<i64: 128, 256>}, {pipeline_mode = #tpu.pipeline_mode<synchronous>, transform_indices = @transform_2, window_bounds = array<i64: 1, 256>}, {pipeline_mode = #tpu.pipeline_mode<synchronous>, transform_indices = @transform_3, window_bounds = array<i64: 128, 128>}, {pipeline_mode = #tpu.pipeline_mode<synchronous>, transform_indices = @transform_4, window_bounds = array<i64: 1, 128>}, {transform_indices = @transform_5, window_bounds = array<i64: 16, 1>}]} {
    %c0 = arith.constant 0 : index
    %c0_0 = arith.constant 0 : index
    %0 = vector.load %arg1[%c0, %c0_0] : memref<16x128xf32, #tpu.memory_space<vmem>>, vector<16x128xf32>
    %1 = arith.truncf %0 : vector<16x128xf32> to vector<16x128xbf16>
    %c0_1 = arith.constant 0 : index
    %c0_2 = arith.constant 0 : index
    %2 = vector.load %arg2[%c0_1, %c0_2] : memref<128x256xbf16, #tpu.memory_space<vmem>>, vector<128x256xbf16>
    %cst = arith.constant dense<0.000000e+00> : vector<16x256xf32>
    %3 = tpu.matmul %1, %2, %cst {dimension_numbers = #tpu.dot_dimension_numbers<[1], [0], [0], [1], [0, 0, 1, 1], [], []>} : vector<16x128xbf16>, vector<128x256xbf16>, vector<16x256xf32> -> vector<16x256xf32>
    %c0_3 = arith.constant 0 : index
    %c0_4 = arith.constant 0 : index
    %4 = vector.load %arg3[%c0_3, %c0_4] : memref<1x256xf32, #tpu.memory_space<vmem>>, vector<1x256xf32>
    %5 = vector.broadcast %4 : vector<1x256xf32> to vector<16x256xf32>
    %6 = arith.addf %3, %5 : vector<16x256xf32>
    %7 = vector.extract_strided_slice %6 {offsets = [0, 0], sizes = [16, 128], strides = [1, 1]} : vector<16x256xf32> to vector<16x128xf32>
    %8 = math.tanh %7 : vector<16x128xf32>
    %9 = vector.extract_strided_slice %6 {offsets = [0, 128], sizes = [16, 128], strides = [1, 1]} : vector<16x256xf32> to vector<16x128xf32>
    %cst_5 = arith.constant 5.000000e-01 : f32
    %10 = vector.broadcast %cst_5 : f32 to vector<16x128xf32>
    %11 = arith.mulf %10, %9 : vector<16x128xf32>
    %12 = math.tanh %11 : vector<16x128xf32>
    %cst_6 = arith.constant 1.000000e+00 : f32
    %13 = vector.broadcast %cst_6 : f32 to vector<16x128xf32>
    %14 = arith.addf %12, %13 : vector<16x128xf32>
    %cst_7 = arith.constant 5.000000e-01 : f32
    %15 = vector.broadcast %cst_7 : f32 to vector<16x128xf32>
    %16 = arith.mulf %15, %14 : vector<16x128xf32>
    %17 = arith.mulf %8, %16 : vector<16x128xf32>
    %18 = arith.truncf %17 : vector<16x128xf32> to vector<16x128xbf16>
    %c0_8 = arith.constant 0 : index
    %c0_9 = arith.constant 0 : index
    %19 = vector.load %arg4[%c0_8, %c0_9] : memref<128x128xbf16, #tpu.memory_space<vmem>>, vector<128x128xbf16>
    %cst_10 = arith.constant dense<0.000000e+00> : vector<16x128xf32>
    %20 = tpu.matmul %18, %19, %cst_10 {dimension_numbers = #tpu.dot_dimension_numbers<[1], [0], [0], [1], [0, 0, 1, 1], [], []>} : vector<16x128xbf16>, vector<128x128xbf16>, vector<16x128xf32> -> vector<16x128xf32>
    %c0_11 = arith.constant 0 : index
    %c0_12 = arith.constant 0 : index
    %21 = vector.load %arg5[%c0_11, %c0_12] : memref<1x128xf32, #tpu.memory_space<vmem>>, vector<1x128xf32>
    %22 = vector.broadcast %21 : vector<1x128xf32> to vector<16x128xf32>
    %23 = arith.addf %20, %22 : vector<16x128xf32>
    %24 = vector.extract_strided_slice %23 {offsets = [0, 0], sizes = [16, 1], strides = [1, 1]} : vector<16x128xf32> to vector<16x1xf32>
    %c0_13 = arith.constant 0 : index
    %c0_14 = arith.constant 0 : index
    %25 = vector.load %arg6[%c0_13, %c0_14] : memref<16x1xf32, #tpu.memory_space<vmem>>, vector<16x1xf32>
    tpu.vector_store %arg6[%c0_13, %c0_14], %24 {strides = array<i32>} : memref<16x1xf32, #tpu.memory_space<vmem>>, vector<16x1xf32>,
    return
  }
  func.func @transform_0(%arg0: i32) -> (i32, i32) {
    %c0_i32 = arith.constant 0 : i32
    %c0_i32_0 = arith.constant 0 : i32
    return %arg0, %c0_i32 : i32, i32
  }
  func.func @transform_1(%arg0: i32) -> (i32, i32) {
    %c0_i32 = arith.constant 0 : i32
    %c0_i32_0 = arith.constant 0 : i32
    %c0_i32_1 = arith.constant 0 : i32
    return %c0_i32, %c0_i32_0 : i32, i32
  }
  func.func @transform_2(%arg0: i32) -> (i32, i32) {
    %c0_i32 = arith.constant 0 : i32
    %c0_i32_0 = arith.constant 0 : i32
    %c0_i32_1 = arith.constant 0 : i32
    return %c0_i32, %c0_i32_0 : i32, i32
  }
  func.func @transform_3(%arg0: i32) -> (i32, i32) {
    %c0_i32 = arith.constant 0 : i32
    %c0_i32_0 = arith.constant 0 : i32
    %c0_i32_1 = arith.constant 0 : i32
    return %c0_i32, %c0_i32_0 : i32, i32
  }
  func.func @transform_4(%arg0: i32) -> (i32, i32) {
    %c0_i32 = arith.constant 0 : i32
    %c0_i32_0 = arith.constant 0 : i32
    %c0_i32_1 = arith.constant 0 : i32
    return %c0_i32, %c0_i32_0 : i32, i32
  }
  func.func @transform_5(%arg0: i32) -> (i32, i32) {
    %c0_i32 = arith.constant 0 : i32
    %c0_i32_0 = arith.constant 0 : i32
    return %arg0, %c0_i32 : i32, i32
  }
}

</mosaic_0001>

<llo_original>
// kernel: tpu_custom_call.1
$region0: #{tpu_custom_call.1}
  #allocation0 [shape = 'u32[]', space=smem, size = 0x4, offset = 0x4, fixed_abs, tag = 'smem constant byte address 0x4 - core index']
  #allocation1 [shape = 'u32[72,128]{1,0:T(1,128)}', space=vmem, size = 0x9000, scoped, tag = 'internal scratch']
  %s0 = inlined_call_operand.hbm [shape: f32[20,128], index: 0, kind: input, shape index: {}]
  %s1 = inlined_call_operand.hbm [shape: bf16[128,256], index: 1, kind: input, shape index: {}]
  %s2 = inlined_call_operand.hbm [shape: f32[1,256], index: 2, kind: input, shape index: {}]
  %s3 = inlined_call_operand.hbm [shape: bf16[128,128], index: 3, kind: input, shape index: {}]
  %s4 = inlined_call_operand.vmem [shape: f32[1,128], index: 4, kind: input, shape index: {}]
  %s5 = inlined_call_operand.vmem [shape: f32[20,1], index: 5, kind: output, shape index: {}]
  %s6 = sld [smem:[#allocation0]]
  $region117: #{tpu_custom_call.1} parent=0
    _
  %s8 = ssub.s32 1, %s6
  %s9 = scalar_select 0, %s8, %s6
  $region1: #{tpu_custom_call.1} parent=0
    #allocation2 [shape = 'u8[16384]{0}', space=vmem, size = 0x4000, scoped, tag = 'input window, operand 0']
    #allocation3 [shape = 's32[2]{0}', space=sflag, size = 0x8, scoped, tag = 'scoped memory for tpu_custom_call.1']
    #allocation4 [shape = 'u8[65536]{0}', space=vmem, size = 0x10000, scoped, tag = 'input window, operand 1, single buffered']
    #allocation5 [shape = 's32[1]{0}', space=sflag, size = 0x4, scoped, tag = 'scoped memory for tpu_custom_call.1']
    #allocation6 [shape = 'u8[1024]{0}', space=vmem, size = 0x400, scoped, tag = 'input window, operand 2, single buffered']
    #allocation7 [shape = 'u8[32768]{0}', space=vmem, size = 0x8000, scoped, tag = 'input window, operand 3, single buffered']
    #allocation8 [shape = 's32[1]{0}', space=sflag, size = 0x4, scoped, tag = 'scoped memory for tpu_custom_call.1']
    #allocation9 [shape = 'u8[16384]{0}', space=vmem, size = 0x4000, scoped, tag = 'output window, operand 0']
    %10 = vsyncpa [#allocation3], 0
    %s11 = scalar_lea.sflag [#allocation3], 1
    %12 = vsyncpa %s11, 0
    %13 = vsyncpa [#allocation5], 0
    %14 = vsyncpa [#allocation8], 0
    loop: start=0, step=1, limit=4
    $region2: #{tpu_custom_call.1} parent=1 // loop_pre_header
      _
    $region3: #{tpu_custom_call.1} parent=1 // loop_header
      %s16 = sphi 0, %s20
      %p17 = scmp.ge.s32.totalorder %s16, 4
      %s26 = sphi 0, %s28
      %s29 = sphi 0, %s26
      %s30 = sphi 0, %s29
      %s46 = sphi 0, %s30
      %s50 = sphi 0, %s50
      %s52 = sphi 0, %s50
      %s53 = sphi 0, %s52
      %s67 = sphi 0, %s53
      %s71 = sphi 0, %s71
      %s73 = sphi 0, %s71
      %s74 = sphi 0, %s73
      %s88 = sphi 0, %s74
      %s92 = sphi 0, %s92
      %s94 = sphi 0, %s92
      %s95 = sphi 0, %s94
      %s109 = sphi 0, %s95
      %s113 = sphi 0, %s113
      %s115 = sphi 0, %s113
      %s116 = sphi 0, %s115
      %s130 = sphi 0, %s116
      %s136 = sphi 0, %s138
      %s139 = sphi 0, %s136
      %s140 = sphi 0, %s139
      %s156 = sphi 0, %s140
    $region4: #{tpu_custom_call.1} parent=1 // loop_header_branch
      %19 = sbr.rel (%p17) target = $region8
    $region5: #{tpu_custom_call.1} parent=1 // loop_body
      %s21 = ssub.s32 %s16, 1
      %s22 = ssub.s32 %s16, 2
      %s23 = sadd.s32 %s16, 1
      %s24 = ssub.s32 %s16, %s23
      %p25 = scmp.eq.s32.totalorder %s24, 0
      %s27 = sadd.s32 %s26, 1
      %s28 = scalar_select %p25, %s26, %s27
      %p31 = pneg %p25
      %p32 = scmp.eq.s32.totalorder %s16, 1
      %p33 = por %p31, %p32
      %p34 = scmp.ne.s32.totalorder %s26, %s29
      %p35 = scmp.eq.s32.totalorder %s16, 0
      %p36 = por %p34, %p35
      %p37 = scmp.ne.s32.totalorder %s26, %s29
      %p38 = scmp.eq.s32.totalorder %s21, 1
      %p39 = por %p37, %p38
      %p40 = scmp.ne.s32.totalorder %s29, %s30
      %p41 = scmp.eq.s32.totalorder %s21, 0
      %p42 = por %p40, %p41
      %p43 = scmp.ne.s32.totalorder %s29, %s30
      %p44 = scmp.eq.s32.totalorder %s22, 1
      %p45 = por %p43, %p44
      %p47 = scmp.ne.s32.totalorder %s30, %s46
      %p48 = scmp.eq.s32.totalorder %s22, 0
      %p49 = por %p47, %p48
      %s51 = sadd.s32 %s50, 1
      %p54 = scmp.eq.s32.totalorder %s16, 1
      %p55 = scmp.ne.s32.totalorder %s50, %s52
      %p56 = scmp.eq.s32.totalorder %s16, 0
      %p57 = por %p55, %p56
      %p58 = scmp.ne.s32.totalorder %s50, %s52
      %p59 = scmp.eq.s32.totalorder %s21, 1
      %p60 = por %p58, %p59
      %p61 = scmp.ne.s32.totalorder %s52, %s53
      %p62 = scmp.eq.s32.totalorder %s21, 0
      %p63 = por %p61, %p62
      %p64 = scmp.ne.s32.totalorder %s52, %s53
      %p65 = scmp.eq.s32.totalorder %s22, 1
      %p66 = por %p64, %p65
      %p68 = scmp.ne.s32.totalorder %s53, %s67
      %p69 = scmp.eq.s32.totalorder %s22, 0
      %p70 = por %p68, %p69
      %s72 = sadd.s32 %s71, 1
      %p75 = scmp.eq.s32.totalorder %s16, 1
      %p76 = scmp.ne.s32.totalorder %s71, %s73
      %p77 = scmp.eq.s32.totalorder %s16, 0
      %p78 = por %p76, %p77
      %p79 = scmp.ne.s32.totalorder %s71, %s73
      %p80 = scmp.eq.s32.totalorder %s21, 1
      %p81 = por %p79, %p80
      %p82 = scmp.ne.s32.totalorder %s73, %s74
      %p83 = scmp.eq.s32.totalorder %s21, 0
      %p84 = por %p82, %p83
      %p85 = scmp.ne.s32.totalorder %s73, %s74
      %p86 = scmp.eq.s32.totalorder %s22, 1
      %p87 = por %p85, %p86
      %p89 = scmp.ne.s32.totalorder %s74, %s88
      %p90 = scmp.eq.s32.totalorder %s22, 0
      %p91 = por %p89, %p90
      %s93 = sadd.s32 %s92, 1
      %p96 = scmp.eq.s32.totalorder %s16, 1
      %p97 = scmp.ne.s32.totalorder %s92, %s94
      %p98 = scmp.eq.s32.totalorder %s16, 0
      %p99 = por %p97, %p98
      %p100 = scmp.ne.s32.totalorder %s92, %s94
      %p101 = scmp.eq.s32.totalorder %s21, 1
      %p102 = por %p100, %p101
      %p103 = scmp.ne.s32.totalorder %s94, %s95
      %p104 = scmp.eq.s32.totalorder %s21, 0
      %p105 = por %p103, %p104
      %p106 = scmp.ne.s32.totalorder %s94, %s95
      %p107 = scmp.eq.s32.totalorder %s22, 1
      %p108 = por %p106, %p107
      %p110 = scmp.ne.s32.totalorder %s95, %s109
      %p111 = scmp.eq.s32.totalorder %s22, 0
      %p112 = por %p110, %p111
      %s114 = sadd.s32 %s113, 1
      %p117 = scmp.eq.s32.totalorder %s16, 1
      %p118 = scmp.ne.s32.totalorder %s113, %s115
      %p119 = scmp.eq.s32.totalorder %s16, 0
      %p120 = por %p118, %p119
      %p121 = scmp.ne.s32.totalorder %s113, %s115
      %p122 = scmp.eq.s32.totalorder %s21, 1
      %p123 = por %p121, %p122
      %p124 = scmp.ne.s32.totalorder %s115, %s116
      %p125 = scmp.eq.s32.totalorder %s21, 0
      %p126 = por %p124, %p125
      %p127 = scmp.ne.s32.totalorder %s115, %s116
      %p128 = scmp.eq.s32.totalorder %s22, 1
      %p129 = por %p127, %p128
      %p131 = scmp.ne.s32.totalorder %s116, %s130
      %p132 = scmp.eq.s32.totalorder %s22, 0
      %p133 = por %p131, %p132
      %s134 = ssub.s32 %s16, %s23
      %p135 = scmp.eq.s32.totalorder %s134, 0
      %s137 = sadd.s32 %s136, 1
      %s138 = scalar_select %p135, %s136, %s137
      %p141 = pneg %p135
      %p142 = scmp.eq.s32.totalorder %s16, 1
      %p143 = por %p141, %p142
      %p144 = scmp.ne.s32.totalorder %s136, %s139
      %p145 = scmp.eq.s32.totalorder %s16, 0
      %p146 = por %p144, %p145
      %p147 = scmp.ne.s32.totalorder %s136, %s139
      %p148 = scmp.eq.s32.totalorder %s21, 1
      %p149 = por %p147, %p148
      %p150 = scmp.ne.s32.totalorder %s139, %s140
      %p151 = scmp.eq.s32.totalorder %s21, 0
      %p152 = por %p150, %p151
      %p153 = scmp.ne.s32.totalorder %s139, %s140
      %p154 = scmp.eq.s32.totalorder %s22, 1
      %p155 = por %p153, %p154
      %p157 = scmp.ne.s32.totalorder %s140, %s156
      %p158 = scmp.eq.s32.totalorder %s22, 0
      %p159 = por %p157, %p158
      %p160 = scmp.le.s32.totalorder 1, %s16
      %p161 = scmp.lt.s32.totalorder %s16, 3
      %p162 = pnand %p160, %p161
      %p163 = pneg %p162
      // Predicated region
      $region9: #{tpu_custom_call.1} parent=5 // pred_check
        _
      $region10: #{tpu_custom_call.1} parent=5 // pred_check_branch
        %165 = sbr.rel (%p162) target = $region12
      $region11: #{tpu_custom_call.1} parent=5 // pred_region
        %s166 = ssub.s32 %s16, 1
        // Predicated region
        $region13: #{tpu_custom_call.1} parent=11 // pred_check
          %p167 = pneg %p63
        $region14: #{tpu_custom_call.1} parent=11 // pred_check_branch
          %169 = sbr.rel (%p167) target = $region16
        $region15: #{tpu_custom_call.1} parent=11 // pred_region
          %171 = vsyncadd [#allocation5], 0
          %s172 = sshll.u32 %s1, 4
          %s173 = int_to_ptr.hbm [resolvable:$true] %s172
          %s174 = sshll.u32 [#allocation4], 4
          %s175 = int_to_ptr.vmem [resolvable:$true] %s174
          %180 = dma.hbm_to_vmem [thread:$0]  %s173, 2048, %s175, [#allocation5], 128, 128, 8
        $region16: #{tpu_custom_call.1} parent=11 // pred_fallthru
          _
        // Predicated region
        $region17: #{tpu_custom_call.1} parent=11 // pred_check
          %p181 = pneg %p84
        $region18: #{tpu_custom_call.1} parent=11 // pred_check_branch
          %183 = sbr.rel (%p181) target = $region20
        $region19: #{tpu_custom_call.1} parent=11 // pred_region
          %185 = vsyncadd [#allocation5], 0
          %s187 = sshll.u32 %s2, 4
          %s188 = int_to_ptr.hbm [resolvable:$true] %s187
          %s189 = sshll.u32 [#allocation6], 4
          %s190 = int_to_ptr.vmem [resolvable:$true] %s189
          %192 = dma.hbm_to_vmem [thread:$0]  %s188, 32, %s190, [#allocation5]
        $region20: #{tpu_custom_call.1} parent=11 // pred_fallthru
          _
        // Predicated region
        $region21: #{tpu_custom_call.1} parent=11 // pred_check
          %p193 = pneg %p105
        $region22: #{tpu_custom_call.1} parent=11 // pred_check_branch
          %195 = sbr.rel (%p193) target = $region24
        $region23: #{tpu_custom_call.1} parent=11 // pred_region
          %197 = vsyncadd [#allocation8], 0
          %s198 = sshll.u32 %s3, 4
          %s199 = int_to_ptr.hbm [resolvable:$true] %s198
          %s200 = sshll.u32 [#allocation7], 4
          %s201 = int_to_ptr.vmem [resolvable:$true] %s200
          %206 = dma.hbm_to_vmem [thread:$0]  %s199, 1024, %s201, [#allocation8], 64, 64, 4
        $region24: #{tpu_custom_call.1} parent=11 // pred_fallthru
          _
        // Predicated region
        $region25: #{tpu_custom_call.1} parent=11 // pred_check
          %p207 = pneg %p126
        $region26: #{tpu_custom_call.1} parent=11 // pred_check_branch
          %209 = sbr.rel (%p207) target = $region28
        $region27: #{tpu_custom_call.1} parent=11 // pred_region
          _
        $region28: #{tpu_custom_call.1} parent=11 // pred_fallthru
          _
      $region12: #{tpu_custom_call.1} parent=5 // pred_fallthru
        _
      %p210 = scmp.lt.s32.totalorder %s16, 2
      // Predicated region
      $region29: #{tpu_custom_call.1} parent=5 // pred_check
        %p211 = pneg %p210
      $region30: #{tpu_custom_call.1} parent=5 // pred_check_branch
        %213 = sbr.rel (%p211) target = $region32
      $region31: #{tpu_custom_call.1} parent=5 // pred_region
        // Predicated region
        $region33: #{tpu_custom_call.1} parent=31 // pred_check
          %p214 = pneg %p36
        $region34: #{tpu_custom_call.1} parent=31 // pred_check_branch
          %216 = sbr.rel (%p214) target = $region36
        $region35: #{tpu_custom_call.1} parent=31 // pred_region
          %s217 = sand.u32 %s26, 1
          %s218 = scalar_lea.sflag [#allocation3], %s217
          %s219 = sand.u32 %s26, 1
          %s220 = smul.addr %s219, 16
          %s221 = scalar_lea.vmem [#allocation2], %s220
          %s222 = smul.u32 2, %s16
          %s223 = ssub.s32 3, %s222
          %p224 = scmp.lt.s32.totalorder %s223, 2
          %s225 = scalar_select %p224, %s223, 2
          %s226 = smul.u32 8, %s225
          %s227 = ssub.s32 16, %s226
          %s228 = sshll.u32 %s227, 4
          %229 = vsyncadd %s218, %s228
          %p230 = scmp.ne.s32.totalorder 0, %s226
          %s231 = smul.addr %s222, 8
          %s232 = scalar_lea.hbm %s0, %s231
          %s233 = smul.u32 8, %s225
          %s234 = sshll.u32 %s232, 4
          %s235 = int_to_ptr.hbm [resolvable:$true] %s234
          %s236 = sshll.u32 %s221, 4
          %s237 = int_to_ptr.vmem [resolvable:$true] %s236
          %s238 = sshll.u32 %s233, 4
          %242 = dma.hbm_to_vmem [thread:$0]  (%p230), %s235, %s238, %s237, %s218, 128, 128, 8
        $region36: #{tpu_custom_call.1} parent=31 // pred_fallthru
          _
      $region32: #{tpu_custom_call.1} parent=5 // pred_fallthru
        _
      %p243 = scmp.le.s32.totalorder 1, %s16
      %p244 = scmp.lt.s32.totalorder %s16, 3
      %p245 = pnand %p243, %p244
      %p246 = pneg %p245
      // Predicated region
      $region37: #{tpu_custom_call.1} parent=5 // pred_check
        _
      $region38: #{tpu_custom_call.1} parent=5 // pred_check_branch
        %248 = sbr.rel (%p245) target = $region40
      $region39: #{tpu_custom_call.1} parent=5 // pred_region
        %s249 = ssub.s32 %s16, 1
        %s250 = sand.u32 %s29, 1
        %s251 = scalar_lea.sflag [#allocation3], %s250
        %s252 = sand.u32 %s29, 1
        %s253 = smul.addr %s252, 16
        %s254 = scalar_lea.vmem [#allocation2], %s253
        // Predicated region
        $region41: #{tpu_custom_call.1} parent=39 // pred_check
          %p255 = pneg %p42
        $region42: #{tpu_custom_call.1} parent=39 // pred_check_branch
          %257 = sbr.rel (%p255) target = $region44
        $region43: #{tpu_custom_call.1} parent=39 // pred_region
          %259 = dma.done %s251, 256
        $region44: #{tpu_custom_call.1} parent=39 // pred_fallthru
          _
        // Predicated region
        $region45: #{tpu_custom_call.1} parent=39 // pred_check
          %p260 = pneg %p63
        $region46: #{tpu_custom_call.1} parent=39 // pred_check_branch
          %262 = sbr.rel (%p260) target = $region48
        $region47: #{tpu_custom_call.1} parent=39 // pred_region
          %264 = dma.done [#allocation5], 2048
        $region48: #{tpu_custom_call.1} parent=39 // pred_fallthru
          _
        // Predicated region
        $region49: #{tpu_custom_call.1} parent=39 // pred_check
          %p265 = pneg %p84
        $region50: #{tpu_custom_call.1} parent=39 // pred_check_branch
          %267 = sbr.rel (%p265) target = $region52
        $region51: #{tpu_custom_call.1} parent=39 // pred_region
          %269 = dma.done [#allocation5], 32
        $region52: #{tpu_custom_call.1} parent=39 // pred_fallthru
          _
        // Predicated region
        $region53: #{tpu_custom_call.1} parent=39 // pred_check
          %p270 = pneg %p105
        $region54: #{tpu_custom_call.1} parent=39 // pred_check_branch
          %272 = sbr.rel (%p270) target = $region56
        $region55: #{tpu_custom_call.1} parent=39 // pred_region
          %274 = dma.done [#allocation8], 1024
        $region56: #{tpu_custom_call.1} parent=39 // pred_fallthru
          _
        %s275 = sand.u32 %s29, 1
        %s276 = scalar_lea.sflag [#allocation3], %s275
        %s277 = sand.u32 %s29, 1
        %s278 = smul.addr %s277, 16
        %s279 = scalar_lea.vmem [#allocation2], %s278
        %p280 = pneg %p42
        %p281 = pneg %p39
        %p282 = pneg %p63
        %p283 = pneg %p60
        %p284 = pneg %p84
        %p285 = pneg %p81
        %p286 = pneg %p105
        %p287 = pneg %p102
        %p288 = pneg %p126
        %p289 = pneg %p123
        %p290 = pneg %p152
        %p291 = pneg %p149
        %s292 = sand.u32 %s139, 1
        %s293 = sand.u32 %s139, 1
        %s294 = smul.addr %s293, 16
        %s295 = scalar_lea.vmem [#allocation9], %s294
        %s296 = smul.u32 2, %s21
        %s297 = ssub.s32 3, %s296
        %p298 = scmp.lt.s32.totalorder %s297, 2
        %s299 = scalar_select %p298, %s297, 2
        %s300 = smul.u32 8, %s299
        %s301 = smul.u32 2, %s21
        %s302 = ssub.s32 3, %s301
        %p303 = scmp.lt.s32.totalorder %s302, 2
        %s304 = scalar_select %p303, %s302, 2
        %s305 = smul.u32 8, %s304
        %v306 = vld [vmem:[%s254] sm:$0xff]
        %v307 = vld [vmem:[%s254 + $0x8] sm:$0xff]
        %v308 = vpack.c.bf16 %v307, %v306
        %v309 = vld [vmem:[#allocation4] sm:$0xff]
        %v310 = vld [vmem:[#allocation4 + $0x8] sm:$0xff]
        %v311 = vld [vmem:[#allocation4 + $0x10] sm:$0xff]
        %v312 = vld [vmem:[#allocation4 + $0x18] sm:$0xff]
        %v313 = vld [vmem:[#allocation4 + $0x20] sm:$0xff]
        %v314 = vld [vmem:[#allocation4 + $0x28] sm:$0xff]
        %v315 = vld [vmem:[#allocation4 + $0x30] sm:$0xff]
        %v316 = vld [vmem:[#allocation4 + $0x38] sm:$0xff]
        %v317 = vld [vmem:[#allocation4 + $0x40] sm:$0xff]
        %v318 = vld [vmem:[#allocation4 + $0x48] sm:$0xff]
        %v319 = vld [vmem:[#allocation4 + $0x50] sm:$0xff]
        %v320 = vld [vmem:[#allocation4 + $0x58] sm:$0xff]
        %v321 = vld [vmem:[#allocation4 + $0x60] sm:$0xff]
        %v322 = vld [vmem:[#allocation4 + $0x68] sm:$0xff]
        %v323 = vld [vmem:[#allocation4 + $0x70] sm:$0xff]
        %v324 = vld [vmem:[#allocation4 + $0x78] sm:$0xff]
        %v325 = vld [vmem:[#allocation6] sm:$0x3]
        %v327 = vperm.slane %v325, 0
        %v328 = vperm.slane %v325, 1
        %v347 = vunpack.c.l.b16 %v309
        %v348 = vunpack.c.h.b16 %v309
        %v349 = vunpack.c.l.b16 %v310
        %v350 = vunpack.c.h.b16 %v310
        %v351 = vunpack.c.l.b16 %v311
        %v352 = vunpack.c.h.b16 %v311
        %v353 = vunpack.c.l.b16 %v312
        %v354 = vunpack.c.h.b16 %v312
        %v355 = vunpack.c.l.b16 %v313
        %v356 = vunpack.c.h.b16 %v313
        %v357 = vunpack.c.l.b16 %v314
        %v358 = vunpack.c.h.b16 %v314
        %v359 = vunpack.c.l.b16 %v315
        %v360 = vunpack.c.h.b16 %v315
        %v361 = vunpack.c.l.b16 %v316
        %v362 = vunpack.c.h.b16 %v316
        %v363 = vunpack.c.l.b16 %v317
        %v364 = vunpack.c.h.b16 %v317
        %v365 = vunpack.c.l.b16 %v318
        %v366 = vunpack.c.h.b16 %v318
        %v367 = vunpack.c.l.b16 %v319
        %v368 = vunpack.c.h.b16 %v319
        %v369 = vunpack.c.l.b16 %v320
        %v370 = vunpack.c.h.b16 %v320
        %v371 = vunpack.c.l.b16 %v321
        %v372 = vunpack.c.h.b16 %v321
        %v373 = vunpack.c.l.b16 %v322
        %v374 = vunpack.c.h.b16 %v322
        %v375 = vunpack.c.l.b16 %v323
        %v376 = vunpack.c.h.b16 %v323
        %v377 = vunpack.c.l.b16 %v324
        %v378 = vunpack.c.h.b16 %v324
        %v379 = vpack.c.b16 %v349, %v347
        %v380 = vpack.c.b16 %v350, %v348
        %v381 = vpack.c.b16 %v353, %v351
        %v382 = vpack.c.b16 %v354, %v352
        %v383 = vpack.c.b16 %v357, %v355
        %v384 = vpack.c.b16 %v358, %v356
        %v385 = vpack.c.b16 %v361, %v359
        %v386 = vpack.c.b16 %v362, %v360
        %v387 = vpack.c.b16 %v365, %v363
        %v388 = vpack.c.b16 %v366, %v364
        %v389 = vpack.c.b16 %v369, %v367
        %v390 = vpack.c.b16 %v370, %v368
        %v391 = vpack.c.b16 %v373, %v371
        %v392 = vpack.c.b16 %v374, %v372
        %v393 = vpack.c.b16 %v377, %v375
        %v394 = vpack.c.b16 %v378, %v376
        %411 = vmatpush.bf16.msra.mxu0 %v393
        %412 = vmatpush.bf16.msra.mxu0 %v391
        %413 = vmatpush.bf16.msra.mxu0 %v389
        %414 = vmatpush.bf16.msra.mxu0 %v387
        %415 = vmatpush.bf16.msra.mxu0 %v385
        %416 = vmatpush.bf16.msra.mxu0 %v383
        %417 = vmatpush.bf16.msra.mxu0 %v381
        %418 = vmatpush.bf16.msra.mxu0 %v379
        %419 = vmatmul.bf16.gmra.mxu0 %v308
        %v420 = vpop.f32.mrf.mxu0
        %v421 = vadd.f32 %v327, %v420
        %v422 = vpop.f32.mrf.mxu0
        %v423 = vadd.f32 %v327, %v422
        %424 = vdwg.mxu0
        %425 = vmatpush.bf16.msra.mxu0 %v394
        %426 = vmatpush.bf16.msra.mxu0 %v392
        %427 = vmatpush.bf16.msra.mxu0 %v390
        %428 = vmatpush.bf16.msra.mxu0 %v388
        %429 = vmatpush.bf16.msra.mxu0 %v386
        %430 = vmatpush.bf16.msra.mxu0 %v384
        %431 = vmatpush.bf16.msra.mxu0 %v382
        %432 = vmatpush.bf16.msra.mxu0 %v380
        %433 = vmatmul.bf16.gmra.mxu0 %v308
        %v434 = vpop.f32.mrf.mxu0
        %v435 = vadd.f32 %v328, %v434
        %v436 = vpop.f32.mrf.mxu0
        %v437 = vadd.f32 %v328, %v436
        %438 = vdwg.mxu0
        %v439 = vtanh.pop %v421
        %v440 = vtanh.pop %v423
        %v441 = vmul.f32 %v435, 0.5
        %v442 = vmul.f32 %v437, 0.5
        %v443 = vtanh.pop %v441
        %v444 = vtanh.pop %v442
        %v445 = vadd.f32 %v443, 1.0
        %v446 = vadd.f32 %v444, 1.0
        %v447 = vmul.f32 %v445, 0.5
        %v448 = vmul.f32 %v446, 0.5
        %v449 = vmul.f32 %v439, %v447
        %v450 = vmul.f32 %v440, %v448
        %v451 = vpack.c.bf16 %v450, %v449
        %v452 = vld [vmem:[#allocation7] sm:$0xf]
        %v453 = vld [vmem:[#allocation7 + $0x4] sm:$0xf]
        %v454 = vld [vmem:[#allocation7 + $0x8] sm:$0xf]
        %v455 = vld [vmem:[#allocation7 + $0xc] sm:$0xf]
        %v456 = vld [vmem:[#allocation7 + $0x10] sm:$0xf]
        %v457 = vld [vmem:[#allocation7 + $0x14] sm:$0xf]
        %v458 = vld [vmem:[#allocation7 + $0x18] sm:$0xf]
        %v459 = vld [vmem:[#allocation7 + $0x1c] sm:$0xf]
        %v460 = vld [vmem:[#allocation7 + $0x20] sm:$0xf]
        %v461 = vld [vmem:[#allocation7 + $0x24] sm:$0xf]
        %v462 = vld [vmem:[#allocation7 + $0x28] sm:$0xf]
        %v463 = vld [vmem:[#allocation7 + $0x2c] sm:$0xf]
        %v464 = vld [vmem:[#allocation7 + $0x30] sm:$0xf]
        %v465 = vld [vmem:[#allocation7 + $0x34] sm:$0xf]
        %v466 = vld [vmem:[#allocation7 + $0x38] sm:$0xf]
        %v467 = vld [vmem:[#allocation7 + $0x3c] sm:$0xf]
        %v468 = vld [vmem:[%s4] sm:$0x1]
        %v470 = vperm.slane %v468, 0
        %v488 = vunpack.c.l.b16 %v452
        %v489 = vunpack.c.l.b16 %v453
        %v490 = vunpack.c.l.b16 %v454
        %v491 = vunpack.c.l.b16 %v455
        %v492 = vunpack.c.l.b16 %v456
        %v493 = vunpack.c.l.b16 %v457
        %v494 = vunpack.c.l.b16 %v458
        %v495 = vunpack.c.l.b16 %v459
        %v496 = vunpack.c.l.b16 %v460
        %v497 = vunpack.c.l.b16 %v461
        %v498 = vunpack.c.l.b16 %v462
        %v499 = vunpack.c.l.b16 %v463
        %v500 = vunpack.c.l.b16 %v464
        %v501 = vunpack.c.l.b16 %v465
        %v502 = vunpack.c.l.b16 %v466
        %v503 = vunpack.c.l.b16 %v467
        %v504 = vpack.c.b16 %v489, %v488
        %v505 = vpack.c.b16 %v491, %v490
        %v506 = vpack.c.b16 %v493, %v492
        %v507 = vpack.c.b16 %v495, %v494
        %v508 = vpack.c.b16 %v497, %v496
        %v509 = vpack.c.b16 %v499, %v498
        %v510 = vpack.c.b16 %v501, %v500
        %v511 = vpack.c.b16 %v503, %v502
        %520 = vmatpush.bf16.msra.mxu0 %v511
        %521 = vmatpush.bf16.msra.mxu0 %v510
        %522 = vmatpush.bf16.msra.mxu0 %v509
        %523 = vmatpush.bf16.msra.mxu0 %v508
        %524 = vmatpush.bf16.msra.mxu0 %v507
        %525 = vmatpush.bf16.msra.mxu0 %v506
        %526 = vmatpush.bf16.msra.mxu0 %v505
        %527 = vmatpush.bf16.msra.mxu0 %v504
        %528 = vmatmul.bf16.gmra.mxu0 %v451
        %v529 = vpop.f32.mrf.mxu0
        %v530 = vadd.f32 %v470, %v529
        %v531 = vpop.f32.mrf.mxu0
        %v532 = vadd.f32 %v470, %v531
        %533 = vdwg.mxu0
        %vm534 = vcmask 7168
        %535 = vst.msk [vmem:[%s295] sm:$0xff] %vm534, %v530
        %536 = vst.msk [vmem:[%s295 + $0x8] sm:$0xff] %vm534, %v532
        %s537 = sand.u32 %s139, 1
        %s538 = sand.u32 %s139, 1
        %s539 = smul.addr %s538, 16
        %s540 = scalar_lea.vmem [#allocation9], %s539
        // Predicated region
        $region57: #{tpu_custom_call.1} parent=39 // pred_check
          %p541 = pneg %p149
        $region58: #{tpu_custom_call.1} parent=39 // pred_check_branch
          %543 = sbr.rel (%p541) target = $region60
        $region59: #{tpu_custom_call.1} parent=39 // pred_region
          %s544 = smul.u32 2, %s21
          %s545 = ssub.s32 3, %s544
          %p546 = scmp.lt.s32.totalorder %s545, 2
          %s547 = scalar_select %p546, %s545, 2
          %s548 = smul.u32 8, %s547
          %p549 = scmp.ne.s32.totalorder 0, %s548
          %s550 = smul.addr %s544, 8
          %s551 = scalar_lea.vmem %s5, %s550
          // Predicated region
          $region61: #{tpu_custom_call.1} parent=59 // pred_check
            %p552 = pneg %p549
          $region62: #{tpu_custom_call.1} parent=59 // pred_check_branch
            %554 = sbr.rel (%p552) target = $region64
          $region63: #{tpu_custom_call.1} parent=59 // pred_region
            // Predicated region
            $region65: #{tpu_custom_call.1} parent=63 // pred_check
              _
            $region66: #{tpu_custom_call.1} parent=63 // pred_check_branch
              %556 = sbr.rel (0) target = $region68
            $region67: #{tpu_custom_call.1} parent=63 // pred_region
              // Predicated region
              $region87: #{tpu_custom_call.1} parent=67 // pred_check
                _
              $region88: #{tpu_custom_call.1} parent=67 // pred_check_branch
                %608 = sbr.rel (0) target = $region90
              $region89: #{tpu_custom_call.1} parent=67 // pred_region
                %s609 = sshrl.u32 %s547, 1
                // While loop
                $region91: #{tpu_custom_call.1} parent=89 // loop_pre_header
                  _
                $region92: #{tpu_custom_call.1} parent=89 // loop_header
                  %s611 = sphi 0, %s613
                  %p612 = scmp.ge.s32.totalorder %s611, %s609
                  %s616 = sphi 0, %s625
                  %s617 = sphi %s540, %s628
                  %s618 = sphi %s551, %s629
                $region93: #{tpu_custom_call.1} parent=89 // loop_header_branch
                  %615 = sbr.rel (%p612) target = $region97
                $region94: #{tpu_custom_call.1} parent=89 // loop_body
                  %v619 = vld [vmem:[%s617] sm:$0xff]
                  %620 = vst [vmem:[%s618] sm:$0xff] %v619
                  %v621 = vld [vmem:[%s617 + $0x8] sm:$0xff]
                  %622 = vst [vmem:[%s618 + $0x8] sm:$0xff] %v621
                  %s623 = sadd.s32 1, %s616
                  %p624 = scmp.ge.s32.totalorder %s623, %s609
                  %s625 = scalar_select %p624, 0, %s623
                  %s626 = smul.u32 %s625, 16
                  %s627 = smul.u32 %s625, 16
                  %s628 = scalar_lea.vmem %s540, %s626 [#allocation9]
                  %s629 = scalar_lea.vmem %s551, %s627
                $region95: #{tpu_custom_call.1} parent=89 // loop_footer
                  %s613 = sadd.s32 %s611, 1
                $region96: #{tpu_custom_call.1} parent=89 // loop_footer_branch
                  %610 = sbr.rel target = $region92
                $region97: #{tpu_custom_call.1} parent=89 // loop_exit
                  _
                %s630 = sshrl.u32 %s547, 1
                %s631 = sand.u32 %s547, 1
                %s632 = smul.u32 %s630, 2
                %s633 = smul.u32 8, %s632
                %s634 = scalar_lea.vmem %s540, %s633 [#allocation9]
                %s635 = smul.u32 8, %s632
                %s636 = scalar_lea.vmem %s551, %s635
                // While loop
                $region98: #{tpu_custom_call.1} parent=89 // loop_pre_header
                  _
                $region99: #{tpu_custom_call.1} parent=89 // loop_header
                  %s638 = sphi 0, %s640
                  %p639 = scmp.ge.s32.totalorder %s638, %s631
                  %s643 = sphi 0, %s650
                  %s644 = sphi %s634, %s653
                  %s645 = sphi %s636, %s654
                $region100: #{tpu_custom_call.1} parent=89 // loop_header_branch
                  %642 = sbr.rel (%p639) target = $region104
                $region101: #{tpu_custom_call.1} parent=89 // loop_body
                  %v646 = vld [vmem:[%s644] sm:$0xff]
                  %647 = vst [vmem:[%s645] sm:$0xff] %v646
                  %s648 = sadd.s32 1, %s643
                  %p649 = scmp.ge.s32.totalorder %s648, %s631
                  %s650 = scalar_select %p649, 0, %s648
                  %s651 = smul.u32 %s650, 8
                  %s652 = smul.u32 %s650, 8
                  %s653 = scalar_lea.vmem %s634, %s651 [#allocation9]
                  %s654 = scalar_lea.vmem %s636, %s652
                $region102: #{tpu_custom_call.1} parent=89 // loop_footer
                  %s640 = sadd.s32 %s638, 1
                $region103: #{tpu_custom_call.1} parent=89 // loop_footer_branch
                  %637 = sbr.rel target = $region99
                $region104: #{tpu_custom_call.1} parent=89 // loop_exit
                  _
              $region90: #{tpu_custom_call.1} parent=67 // pred_fallthru
                _
              // Predicated region
              $region105: #{tpu_custom_call.1} parent=67 // pred_check
                _
              $region106: #{tpu_custom_call.1} parent=67 // pred_check_branch
                %656 = sbr.rel target = $region108
              $region107: #{tpu_custom_call.1} parent=67 // pred_region
                _
              $region108: #{tpu_custom_call.1} parent=67 // pred_fallthru
                _
            $region68: #{tpu_custom_call.1} parent=63 // pred_fallthru
              _
            // Predicated region
            $region69: #{tpu_custom_call.1} parent=63 // pred_check
              _
            $region70: #{tpu_custom_call.1} parent=63 // pred_check_branch
              %558 = sbr.rel target = $region72
            $region71: #{tpu_custom_call.1} parent=63 // pred_region
              %s560 = ssub.s32 256, 1
              %s561 = sshrl.u32 %s547, 1
              // While loop
              $region73: #{tpu_custom_call.1} parent=71 // loop_pre_header
                _
              $region74: #{tpu_custom_call.1} parent=71 // loop_header
                %s563 = sphi 0, %s565
                %p564 = scmp.ge.s32.totalorder %s563, %s561
                %s568 = sphi 0, %s577
                %s569 = sphi %s540, %s580
                %s570 = sphi %s551, %s581
              $region75: #{tpu_custom_call.1} parent=71 // loop_header_branch
                %567 = sbr.rel (%p564) target = $region79
              $region76: #{tpu_custom_call.1} parent=71 // loop_body
                %v571 = vld [vmem:[%s569] sm:%s560]
                %572 = vst [vmem:[%s570] sm:%s560] %v571
                %v573 = vld [vmem:[%s569 + $0x8] sm:%s560]
                %574 = vst [vmem:[%s570 + $0x8] sm:%s560] %v573
                %s575 = sadd.s32 1, %s568
                %p576 = scmp.ge.s32.totalorder %s575, %s561
                %s577 = scalar_select %p576, 0, %s575
                %s578 = smul.u32 %s577, 16
                %s579 = smul.u32 %s577, 16
                %s580 = scalar_lea.vmem %s540, %s578 [#allocation9]
                %s581 = scalar_lea.vmem %s551, %s579
              $region77: #{tpu_custom_call.1} parent=71 // loop_footer
                %s565 = sadd.s32 %s563, 1
              $region78: #{tpu_custom_call.1} parent=71 // loop_footer_branch
                %562 = sbr.rel target = $region74
              $region79: #{tpu_custom_call.1} parent=71 // loop_exit
                _
              %s582 = sshrl.u32 %s547, 1
              %s583 = sand.u32 %s547, 1
              %s584 = smul.u32 %s582, 2
              %s585 = smul.u32 8, %s584
              %s586 = scalar_lea.vmem %s540, %s585 [#allocation9]
              %s587 = smul.u32 8, %s584
              %s588 = scalar_lea.vmem %s551, %s587
              // While loop
              $region80: #{tpu_custom_call.1} parent=71 // loop_pre_header
                _
              $region81: #{tpu_custom_call.1} parent=71 // loop_header
                %s590 = sphi 0, %s592
                %p591 = scmp.ge.s32.totalorder %s590, %s583
                %s595 = sphi 0, %s602
                %s596 = sphi %s586, %s605
                %s597 = sphi %s588, %s606
              $region82: #{tpu_custom_call.1} parent=71 // loop_header_branch
                %594 = sbr.rel (%p591) target = $region86
              $region83: #{tpu_custom_call.1} parent=71 // loop_body
                %v598 = vld [vmem:[%s596] sm:%s560]
                %599 = vst [vmem:[%s597] sm:%s560] %v598
                %s600 = sadd.s32 1, %s595
                %p601 = scmp.ge.s32.totalorder %s600, %s583
                %s602 = scalar_select %p601, 0, %s600
                %s603 = smul.u32 %s602, 8
                %s604 = smul.u32 %s602, 8
                %s605 = scalar_lea.vmem %s586, %s603 [#allocation9]
                %s606 = scalar_lea.vmem %s588, %s604
              $region84: #{tpu_custom_call.1} parent=71 // loop_footer
                %s592 = sadd.s32 %s590, 1
              $region85: #{tpu_custom_call.1} parent=71 // loop_footer_branch
                %589 = sbr.rel target = $region81
              $region86: #{tpu_custom_call.1} parent=71 // loop_exit
                _
            $region72: #{tpu_custom_call.1} parent=63 // pred_fallthru
              _
          $region64: #{tpu_custom_call.1} parent=59 // pred_fallthru
            _
          %657 = vnop
        $region60: #{tpu_custom_call.1} parent=39 // pred_fallthru
          _
      $region40: #{tpu_custom_call.1} parent=5 // pred_fallthru
        _
      %p658 = scmp.le.s32.totalorder 2, %s16
      // Predicated region
      $region109: #{tpu_custom_call.1} parent=5 // pred_check
        %p659 = pneg %p658
      $region110: #{tpu_custom_call.1} parent=5 // pred_check_branch
        %661 = sbr.rel (%p659) target = $region112
      $region111: #{tpu_custom_call.1} parent=5 // pred_region
        %s662 = ssub.s32 %s16, 2
        // Predicated region
        $region113: #{tpu_custom_call.1} parent=111 // pred_check
          %p663 = pneg %p155
        $region114: #{tpu_custom_call.1} parent=111 // pred_check_branch
          %665 = sbr.rel (%p663) target = $region116
        $region115: #{tpu_custom_call.1} parent=111 // pred_region
          %s666 = sand.u32 %s140, 1
          %s667 = sand.u32 %s140, 1
          %s668 = smul.addr %s667, 16
          %s669 = scalar_lea.vmem [#allocation9], %s668
        $region116: #{tpu_custom_call.1} parent=111 // pred_fallthru
          _
      $region112: #{tpu_custom_call.1} parent=5 // pred_fallthru
        _
    $region6: #{tpu_custom_call.1} parent=1 // loop_footer
      %s20 = sadd.s32 1, %s16
    $region7: #{tpu_custom_call.1} parent=1 // loop_footer_branch
      %15 = sbr.rel target = $region3
    $region8: #{tpu_custom_call.1} parent=1 // loop_exit
      _
    %670 = vsyncpa [#allocation3], 1
    %s671 = scalar_lea.sflag [#allocation3], 1
    %672 = vsyncpa %s671, 1
    %673 = vsyncpa [#allocation5], 1
    %674 = vsyncpa [#allocation8], 1

</llo_original>
